<compile_context>
chip_gen: v7x
topology: tpu7x:2x2x1
jax: 0.10.0
libtpu: 0.0.40
codegen_flags: <defaults>
</compile_context>

<pallas_src>
import functools

import jax
import jax.numpy as jnp
import numpy as np
from jax.experimental import pallas as pl
from jax.experimental.pallas import tpu as pltpu


def make_sinusoid_table(n_position: int, d_hid: int, dtype=jnp.float32) -> jnp.ndarray:
    """Deterministic sinusoid position encoding table, shape (n_position, d_hid)."""
    pos = np.arange(n_position, dtype=np.float64)[:, None]              # (P, 1)
    hid = np.arange(d_hid, dtype=np.int64)[None, :]                      # (1, D)
    angle = pos / np.power(10000.0, 2.0 * (hid // 2) / float(d_hid))     # (P, D)
    table = np.zeros((n_position, d_hid), dtype=np.float64)
    table[:, 0::2] = np.sin(angle[:, 0::2])
    table[:, 1::2] = np.cos(angle[:, 1::2])
    return jnp.asarray(table, dtype=dtype)


def _pos_enc_kernel(x_ref, pos_ref, o_ref, *, ts: int):
    # x_ref / o_ref: (ts, D) — leading batch dim squeezed by the BlockSpec.
    # pos_ref: either (ts, D) (tiled like x) or (S, D) (fully VMEM-resident table);
    # in the resident case pick this s-tile's rows with an aligned dynamic slice.
    if pos_ref.shape[0] == ts:
        pos = pos_ref[...]
    else:
        s0 = pl.multiple_of(pl.program_id(0) * ts, ts)
        pos = pos_ref[pl.ds(s0, ts), :]
    o_ref[...] = x_ref[...] + pos


_SUBLANE_FOR_ITEMSIZE = {4: 8, 2: 16, 1: 32}   # min sublane multiple per dtype width
_TARGET_BLOCK_BYTES = 4 * 1024 * 1024          # ~4 MiB/block (amortizes ~0.35 us/step)
_MIN_PALLAS_BYTES = 1 * 1024 * 1024            # below this, fused XLA add wins
_RESIDENT_POS_BYTES = 2 * 1024 * 1024          # keep table fully in VMEM below this
_VMEM_LIMIT_CAP = 32 * 1024 * 1024             # <= v7x scoped default, << 64 MiB physical


def _choose_seq_tile(S: int, D: int, itemsize: int, sublane: int,
                     prefer_multiple_blocks: bool) -> int | None:
    """Largest multiple of `sublane` dividing S whose (ts, D) block stays near the
    VMEM budget. Returns None if no legal tile exists (caller falls back to XLA)."""
    max_rows = max(sublane, _TARGET_BLOCK_BYTES // max(1, D * itemsize))

    def best_divisor(limit: int) -> int | None:
        best = None
        t = sublane
        while t <= min(S, limit):
            if S % t == 0:
                best = t
            t += sublane
        return best

    ts = best_divisor(max_rows)
    if ts is None:
        return None
    # With B == 1 the batch axis contributes no parallelism; make sure the leading
    # (sequence) grid axis has >= 2 blocks so v7x's second TensorCore isn't idle.
    if prefer_multiple_blocks and ts == S and S >= 2 * sublane:
        smaller = best_divisor(S // 2)
        if smaller is not None:
            ts = smaller
    return ts


def positional_encoding(x: jnp.ndarray, pos_table: jnp.ndarray,
                        *, use_pallas: bool | None = None,
                        donate_x: bool = False) -> jnp.ndarray:
    """x: (B, S, D); pos_table: (n_position, D). Returns x + pos_table[:S] (broadcast over B).

    For best performance pass a pre-sliced table of length S in x.dtype (skips the
    per-call slice + cast glue op entirely)."""
    B, S, D = x.shape
    P, Dt = pos_table.shape
    if Dt != D:
        raise ValueError(f"pos_table hidden dim {Dt} != x hidden dim {D}")
    if S > P:
        raise ValueError(f"sequence length {S} exceeds positional table size {P}")

    # Hoisted-glue fast path: no extra XLA op when the caller already matched
    # length & dtype; otherwise do the (small) slice + cast once here.
    if P == S and pos_table.dtype == x.dtype:
        pos_slice = pos_table
    else:
        pos_slice = pos_table[:S, :].astype(x.dtype)

    itemsize = jnp.dtype(x.dtype).itemsize
    total_bytes = B * S * D * itemsize
    if use_pallas is None:
        # Only launch the kernel when the output is lane-dense and the problem is
        # big enough for launch / per-step overhead to amortize.
        use_pallas = (D % 128 == 0) and (total_bytes >= _MIN_PALLAS_BYTES)
    if not use_pallas:
        return x + pos_slice[None, :, :]

    sublane = _SUBLANE_FOR_ITEMSIZE.get(itemsize, 8)
    ts = _choose_seq_tile(S, D, itemsize, sublane, prefer_multiple_blocks=(B == 1))
    if ts is None:
        # No sublane-multiple tile divides S: rather than requesting a possibly
        # enormous full-sequence block (VMEM OOM cliff on v7x), use the XLA add.
        return x + pos_slice[None, :, :]

    n_s = S // ts
    # Sequence OUTER, batch INNER: the pos block index is unchanged across the
    # inner batch steps, so its re-DMA is elided and the table is read from HBM
    # only once per sequence tile instead of once per (tile, batch) pair.
    grid = (n_s, B)

    pos_bytes = S * D * itemsize
    resident_pos = pos_bytes <= _RESIDENT_POS_BYTES
    if resident_pos:
        # Whole (S, D) table slice lives in VMEM for the entire kernel.
        pos_spec = pl.BlockSpec((S, D), lambda s, b: (0, 0))
        pos_buf_bytes = 2 * pos_bytes
    else:
        pos_spec = pl.BlockSpec((ts, D), lambda s, b: (s, 0))
        pos_buf_bytes = 2 * ts * D * itemsize

    block_bytes = ts * D * itemsize
    # x + out double-buffered, plus the pos buffers; explicit limit so bigger
    # blocks also fit v5e's 16 MiB scoped default while staying well under v7x's
    # 64 MiB physical VMEM.
    vmem_need = 2 * 2 * block_bytes + pos_buf_bytes
    vmem_limit = int(min(max(2 * vmem_need, 16 * 1024 * 1024), _VMEM_LIMIT_CAP))

    extra_kwargs = {}
    if donate_x:
        # Free win when the caller no longer needs x: reuse its buffer for the output.
        extra_kwargs["input_output_aliases"] = {0: 0}

    cost = pl.CostEstimate(
        flops=B * S * D,
        transcendentals=0,
        bytes_accessed=(2 * B * S * D + S * D) * itemsize,  # post-reuse traffic
    )

    return pl.pallas_call(
        functools.partial(_pos_enc_kernel, ts=ts),
        out_shape=jax.ShapeDtypeStruct((B, S, D), x.dtype),
        grid_spec=pltpu.PrefetchScalarGridSpec(
            num_scalar_prefetch=0,
            grid=grid,
            in_specs=[
                pl.BlockSpec((pl.Squeezed(), ts, D), lambda s, b: (b, s, 0)),
                pos_spec,
            ],
            out_specs=pl.BlockSpec((pl.Squeezed(), ts, D), lambda s, b: (b, s, 0)),
        ),
        compiler_params=pltpu.CompilerParams(
            dimension_semantics=("parallel", "parallel"),
            vmem_limit_bytes=vmem_limit,
        ),
        cost_estimate=cost,
        **extra_kwargs,
    )(x, pos_slice)


if __name__ == "__main__":
    n_position = 200

    # --- Pallas kernel path (lane-dense D, forced on at small demo size) ---
    B, S, D = 2, 16, 128
    key = jax.random.PRNGKey(0)
    x = jax.random.normal(key, (B, S, D), dtype=jnp.float32)
    pos_table = make_sinusoid_table(n_position, D)

    out = jax.block_until_ready(positional_encoding(x, pos_table, use_pallas=True))
    ref = x + pos_table[None, :S, :]
    assert out.shape == (B, S, D)
    assert jnp.allclose(out, ref, atol=1e-6), "Pallas path mismatch vs reference"

    # --- B == 1: exercises the split-sequence + resident-table-slicing path
    #     (keeps both v7x TensorCores busy for single-batch shapes) ---
    x1 = jax.random.normal(jax.random.PRNGKey(2), (1, S, D), dtype=jnp.float32)
    out1 = jax.block_until_ready(positional_encoding(x1, pos_table, use_pallas=True))
    assert jnp.allclose(out1, x1 + pos_table[None, :S, :], atol=1e-6), "B==1 path mismatch"

    # --- auto fallback path on a tiny / non-lane-dense shape ---
    x2 = jax.random.normal(jax.random.PRNGKey(1), (2, 8, 32), dtype=jnp.float32)
    tbl2 = make_sinusoid_table(n_position, 32)
    out2 = jax.block_until_ready(positional_encoding(x2, tbl2))  # auto: plain fused add
    assert jnp.allclose(out2, x2 + tbl2[None, :8, :], atol=1e-6), "fallback path mismatch"

    print("KERNEL_OK")
</pallas_src>

<mosaic_0001>
module attributes {stable_mosaic.version = 11 : i64} {
  func.func @_pos_enc_kernel(%arg0: i32, %arg1: i32, %arg2: memref<1x16x128xf32, #tpu.memory_space<vmem>>, %arg3: memref<16x128xf32, #tpu.memory_space<vmem>>, %arg4: memref<1x16x128xf32, #tpu.memory_space<vmem>>) attributes {dimension_semantics = [#tpu.dimension_semantics<parallel>, #tpu.dimension_semantics<parallel>], iteration_bounds = array<i64: 1, 2>, scalar_prefetch = 0 : i64, scratch_operands = 0 : i64, tpu.core_type = #tpu.core_type<tc>, window_params = [{transform_indices = @transform_0, window_bounds = array<i64: 1, 16, 128>}, {pipeline_mode = #tpu.pipeline_mode<synchronous>, transform_indices = @transform_1, window_bounds = array<i64: 16, 128>}, {transform_indices = @transform_2, window_bounds = array<i64: 1, 16, 128>}]} {
    %c0 = arith.constant 0 : index
    %c0_0 = arith.constant 0 : index
    %0 = vector.load %arg3[%c0, %c0_0] : memref<16x128xf32, #tpu.memory_space<vmem>>, vector<16x128xf32>
    %c0_1 = arith.constant 0 : index
    %c0_2 = arith.constant 0 : index
    %c0_3 = arith.constant 0 : index
    %1 = vector.load %arg2[%c0_1, %c0_2, %c0_3] : memref<1x16x128xf32, #tpu.memory_space<vmem>>, vector<1x16x128xf32>
    %2 = vector.shape_cast %1 : vector<1x16x128xf32> to vector<16x128xf32>
    %3 = arith.addf %2, %0 : vector<16x128xf32>
    %c0_4 = arith.constant 0 : index
    %c0_5 = arith.constant 0 : index
    %c0_6 = arith.constant 0 : index
    %4 = vector.load %arg4[%c0_4, %c0_5, %c0_6] : memref<1x16x128xf32, #tpu.memory_space<vmem>>, vector<1x16x128xf32>
    %5 = vector.shape_cast %4 : vector<1x16x128xf32> to vector<16x128xf32>
    %6 = vector.shape_cast %3 : vector<16x128xf32> to vector<1x16x128xf32>
    tpu.vector_store %arg4[%c0_4, %c0_5, %c0_6], %6 {strides = array<i32>} : memref<1x16x128xf32, #tpu.memory_space<vmem>>, vector<1x16x128xf32>,
    return
  }
  func.func @transform_0(%arg0: i32, %arg1: i32) -> (i32, i32, i32) {
    %c0_i32 = arith.constant 0 : i32
    %c0_i32_0 = arith.constant 0 : i32
    return %arg1, %arg0, %c0_i32 : i32, i32, i32
  }
  func.func @transform_1(%arg0: i32, %arg1: i32) -> (i32, i32) {
    %c0_i32 = arith.constant 0 : i32
    %c0_i32_0 = arith.constant 0 : i32
    %c0_i32_1 = arith.constant 0 : i32
    return %c0_i32, %c0_i32_0 : i32, i32
  }
  func.func @transform_2(%arg0: i32, %arg1: i32) -> (i32, i32, i32) {
    %c0_i32 = arith.constant 0 : i32
    %c0_i32_0 = arith.constant 0 : i32
    return %arg1, %arg0, %c0_i32 : i32, i32, i32
  }
}

</mosaic_0001>

<llo_original>
// kernel: tpu_custom_call.1
$region0: #{tpu_custom_call.1}
  #allocation0 [shape = 'u32[]', space=smem, size = 0x4, offset = 0x4, fixed_abs, tag = 'smem constant byte address 0x4 - core index']
  #allocation1 [shape = 'u32[144,128]{1,0:T(1,128)}', space=vmem, size = 0x12000, scoped, tag = 'internal scratch']
  %s0 = inlined_call_operand.hbm [shape: f32[2,16,128], index: 0, kind: input, shape index: {}]
  %s1 = inlined_call_operand.hbm [shape: f32[16,128], index: 1, kind: input, shape index: {}]
  %s2 = inlined_call_operand.hbm [shape: f32[2,16,128], index: 2, kind: output, shape index: {}]
  %s3 = sld [smem:[#allocation0]]
  $region49: #{tpu_custom_call.1} parent=0
    _
  %s5 = ssub.s32 1, %s3
  %s6 = scalar_select 0, %s5, %s3
  $region1: #{tpu_custom_call.1} parent=0
    #allocation2 [shape = 'u8[16384]{0}', space=vmem, size = 0x4000, scoped, tag = 'input window, operand 0']
    #allocation3 [shape = 's32[2]{0}', space=sflag, size = 0x8, scoped, tag = 'scoped memory for tpu_custom_call.1']
    #allocation4 [shape = 's32[2]{0}', space=sflag, size = 0x8, scoped, tag = 'scoped memory for tpu_custom_call.1']
    #allocation5 [shape = 'u8[8192]{0}', space=vmem, size = 0x2000, scoped, tag = 'input window, operand 1, single buffered']
    #allocation6 [shape = 's32[1]{0}', space=sflag, size = 0x4, scoped, tag = 'scoped memory for tpu_custom_call.1']
    #allocation7 [shape = 'u8[16384]{0}', space=vmem, size = 0x4000, scoped, tag = 'output window, operand 0']
    %7 = vsyncpa [#allocation3], 0
    %s8 = scalar_lea.sflag [#allocation3], 1
    %9 = vsyncpa %s8, 0
    %10 = vsyncpa [#allocation6], 0
    %11 = vsyncpa [#allocation4], 0
    %s12 = scalar_lea.sflag [#allocation4], 1
    %13 = vsyncpa %s12, 0
    loop: start=0, step=1, limit=4
    $region2: #{tpu_custom_call.1} parent=1 // loop_pre_header
      _
    $region3: #{tpu_custom_call.1} parent=1 // loop_header
      %s15 = sphi 0, %s19
      %p16 = scmp.ge.s32.totalorder %s15, 4
      %s22 = sphi 0, %s34
      %s23 = sphi 0, %s30
      %s24 = sphi 0, %s22
      %s25 = sphi 0, %s23
      %s26 = sphi 0, %s24
      %s27 = sphi 0, %s25
      %s39 = sphi 0, %s41
      %s42 = sphi 0, %s39
      %s43 = sphi 0, %s42
      %s59 = sphi 0, %s43
      %s63 = sphi 0, %s63
      %s65 = sphi 0, %s63
      %s66 = sphi 0, %s65
      %s80 = sphi 0, %s66
      %s88 = sphi 0, %s90
      %s91 = sphi 0, %s88
      %s92 = sphi 0, %s91
      %s108 = sphi 0, %s92
    $region4: #{tpu_custom_call.1} parent=1 // loop_header_branch
      %18 = sbr.rel (%p16) target = $region8
    $region5: #{tpu_custom_call.1} parent=1 // loop_body
      %s20 = ssub.s32 %s15, 1
      %s21 = ssub.s32 %s15, 2
      %s28 = sadd.s32 1, %s23
      %p29 = scmp.ge.s32.totalorder %s28, 2
      %s30 = scalar_select %p29, 0, %s28
      %s31 = sadd.s32 1, %s22
      %s32 = scalar_select %p29, %s31, %s22
      %p33 = scmp.ge.s32.totalorder %s32, 1
      %s34 = scalar_select %p33, 0, %s32
      %s35 = ssub.s32 %s23, %s30
      %s36 = ssub.s32 %s22, %s34
      %s37 = sor.u32 %s35, %s36
      %p38 = scmp.eq.s32.totalorder %s37, 0
      %s40 = sadd.s32 %s39, 1
      %s41 = scalar_select %p38, %s39, %s40
      %p44 = pneg %p38
      %p45 = scmp.eq.s32.totalorder %s15, 1
      %p46 = por %p44, %p45
      %p47 = scmp.ne.s32.totalorder %s39, %s42
      %p48 = scmp.eq.s32.totalorder %s15, 0
      %p49 = por %p47, %p48
      %p50 = scmp.ne.s32.totalorder %s39, %s42
      %p51 = scmp.eq.s32.totalorder %s20, 1
      %p52 = por %p50, %p51
      %p53 = scmp.ne.s32.totalorder %s42, %s43
      %p54 = scmp.eq.s32.totalorder %s20, 0
      %p55 = por %p53, %p54
      %p56 = scmp.ne.s32.totalorder %s42, %s43
      %p57 = scmp.eq.s32.totalorder %s21, 1
      %p58 = por %p56, %p57
      %p60 = scmp.ne.s32.totalorder %s43, %s59
      %p61 = scmp.eq.s32.totalorder %s21, 0
      %p62 = por %p60, %p61
      %s64 = sadd.s32 %s63, 1
      %p67 = scmp.eq.s32.totalorder %s15, 1
      %p68 = scmp.ne.s32.totalorder %s63, %s65
      %p69 = scmp.eq.s32.totalorder %s15, 0
      %p70 = por %p68, %p69
      %p71 = scmp.ne.s32.totalorder %s63, %s65
      %p72 = scmp.eq.s32.totalorder %s20, 1
      %p73 = por %p71, %p72
      %p74 = scmp.ne.s32.totalorder %s65, %s66
      %p75 = scmp.eq.s32.totalorder %s20, 0
      %p76 = por %p74, %p75
      %p77 = scmp.ne.s32.totalorder %s65, %s66
      %p78 = scmp.eq.s32.totalorder %s21, 1
      %p79 = por %p77, %p78
      %p81 = scmp.ne.s32.totalorder %s66, %s80
      %p82 = scmp.eq.s32.totalorder %s21, 0
      %p83 = por %p81, %p82
      %s84 = ssub.s32 %s23, %s30
      %s85 = ssub.s32 %s22, %s34
      %s86 = sor.u32 %s84, %s85
      %p87 = scmp.eq.s32.totalorder %s86, 0
      %s89 = sadd.s32 %s88, 1
      %s90 = scalar_select %p87, %s88, %s89
      %p93 = pneg %p87
      %p94 = scmp.eq.s32.totalorder %s15, 1
      %p95 = por %p93, %p94
      %p96 = scmp.ne.s32.totalorder %s88, %s91
      %p97 = scmp.eq.s32.totalorder %s15, 0
      %p98 = por %p96, %p97
      %p99 = scmp.ne.s32.totalorder %s88, %s91
      %p100 = scmp.eq.s32.totalorder %s20, 1
      %p101 = por %p99, %p100
      %p102 = scmp.ne.s32.totalorder %s91, %s92
      %p103 = scmp.eq.s32.totalorder %s20, 0
      %p104 = por %p102, %p103
      %p105 = scmp.ne.s32.totalorder %s91, %s92
      %p106 = scmp.eq.s32.totalorder %s21, 1
      %p107 = por %p105, %p106
      %p109 = scmp.ne.s32.totalorder %s92, %s108
      %p110 = scmp.eq.s32.totalorder %s21, 0
      %p111 = por %p109, %p110
      %p112 = scmp.le.s32.totalorder 1, %s15
      %p113 = scmp.lt.s32.totalorder %s15, 3
      %p114 = pnand %p112, %p113
      %p115 = pneg %p114
      // Predicated region
      $region9: #{tpu_custom_call.1} parent=5 // pred_check
        _
      $region10: #{tpu_custom_call.1} parent=5 // pred_check_branch
        %117 = sbr.rel (%p114) target = $region12
      $region11: #{tpu_custom_call.1} parent=5 // pred_region
        %s118 = ssub.s32 %s15, 1
        // Predicated region
        $region13: #{tpu_custom_call.1} parent=11 // pred_check
          %p119 = pneg %p76
        $region14: #{tpu_custom_call.1} parent=11 // pred_check_branch
          %121 = sbr.rel (%p119) target = $region16
        $region15: #{tpu_custom_call.1} parent=11 // pred_region
          %s123 = ssub.s32 256, 256
          %124 = vsyncadd [#allocation6], %s123
          %s125 = sshll.u32 [#allocation5], 4
          %s126 = int_to_ptr.vmem [resolvable:$true] %s125
          %131 = dma.hbm_to_vmem [thread:$0]  %s1, 256, %s126, [#allocation6], 128, 128, 8
        $region16: #{tpu_custom_call.1} parent=11 // pred_fallthru
          _
      $region12: #{tpu_custom_call.1} parent=5 // pred_fallthru
        _
      %p132 = scmp.lt.s32.totalorder %s15, 2
      // Predicated region
      $region17: #{tpu_custom_call.1} parent=5 // pred_check
        %p133 = pneg %p132
      $region18: #{tpu_custom_call.1} parent=5 // pred_check_branch
        %135 = sbr.rel (%p133) target = $region20
      $region19: #{tpu_custom_call.1} parent=5 // pred_region
        // Predicated region
        $region21: #{tpu_custom_call.1} parent=19 // pred_check
          %p136 = pneg %p49
        $region22: #{tpu_custom_call.1} parent=19 // pred_check_branch
          %138 = sbr.rel (%p136) target = $region24
        $region23: #{tpu_custom_call.1} parent=19 // pred_region
          %s139 = sand.u32 %s39, 1
          %s140 = scalar_lea.sflag [#allocation3], %s139
          %s141 = sand.u32 %s39, 1
          %s142 = smul.addr %s141, 16
          %s143 = scalar_lea.vmem [#allocation2], %s142
          %s144 = smul.u32 2, %s22
          %s146 = ssub.s32 256, 256
          %147 = vsyncadd %s140, %s146
          %s148 = smul.addr %s23, 2
          %s149 = sadd.s32 %s144, %s148
          %s150 = smul.addr %s149, 128
          %s151 = scalar_lea.hbm %s0, %s150
          %s152 = sshll.u32 %s143, 4
          %s153 = int_to_ptr.vmem [resolvable:$true] %s152
          %158 = dma.hbm_to_vmem [thread:$0]  %s151, 256, %s153, %s140, 128, 128, 8
        $region24: #{tpu_custom_call.1} parent=19 // pred_fallthru
          _
      $region20: #{tpu_custom_call.1} parent=5 // pred_fallthru
        _
      %p159 = scmp.le.s32.totalorder 1, %s15
      %p160 = scmp.lt.s32.totalorder %s15, 3
      %p161 = pnand %p159, %p160
      %p162 = pneg %p161
      // Predicated region
      $region25: #{tpu_custom_call.1} parent=5 // pred_check
        _
      $region26: #{tpu_custom_call.1} parent=5 // pred_check_branch
        %164 = sbr.rel (%p161) target = $region28
      $region27: #{tpu_custom_call.1} parent=5 // pred_region
        %s165 = ssub.s32 %s15, 1
        %s166 = sand.u32 %s42, 1
        %s167 = scalar_lea.sflag [#allocation3], %s166
        %s168 = sand.u32 %s42, 1
        %s169 = smul.addr %s168, 16
        %s170 = scalar_lea.vmem [#allocation2], %s169
        // Predicated region
        $region29: #{tpu_custom_call.1} parent=27 // pred_check
          %p171 = pneg %p55
        $region30: #{tpu_custom_call.1} parent=27 // pred_check_branch
          %173 = sbr.rel (%p171) target = $region32
        $region31: #{tpu_custom_call.1} parent=27 // pred_region
          %174 = dma.done %s167, 256
        $region32: #{tpu_custom_call.1} parent=27 // pred_fallthru
          _
        // Predicated region
        $region33: #{tpu_custom_call.1} parent=27 // pred_check
          %p175 = pneg %p76
        $region34: #{tpu_custom_call.1} parent=27 // pred_check_branch
          %177 = sbr.rel (%p175) target = $region36
        $region35: #{tpu_custom_call.1} parent=27 // pred_region
          %178 = dma.done [#allocation6], 256
        $region36: #{tpu_custom_call.1} parent=27 // pred_fallthru
          _
        %s179 = sand.u32 %s42, 1
        %s180 = scalar_lea.sflag [#allocation3], %s179
        %s181 = sand.u32 %s42, 1
        %s182 = smul.addr %s181, 16
        %s183 = scalar_lea.vmem [#allocation2], %s182
        %p184 = pneg %p55
        %p185 = pneg %p52
        %p186 = pneg %p76
        %p187 = pneg %p73
        %p188 = pneg %p104
        %p189 = pneg %p101
        %s190 = sand.u32 %s91, 1
        %s191 = scalar_lea.sflag [#allocation4], %s190
        %s192 = sand.u32 %s91, 1
        %s193 = smul.addr %s192, 16
        %s194 = scalar_lea.vmem [#allocation7], %s193
        %s195 = smul.u32 2, %s24
        %s196 = smul.u32 2, %s24
        %v197 = vld [vmem:[#allocation5] sm:$0xff]
        %v198 = vld [vmem:[#allocation5 + $0x8] sm:$0xff]
        %v199 = vld [vmem:[%s170] sm:$0xff]
        %v200 = vld [vmem:[%s170 + $0x8] sm:$0xff]
        %v201 = vadd.f32 %v199, %v197
        %v202 = vadd.f32 %v200, %v198
        %203 = vst [vmem:[%s194] sm:$0xff] %v201
        %204 = vst [vmem:[%s194 + $0x8] sm:$0xff] %v202
        %s205 = sand.u32 %s91, 1
        %s206 = scalar_lea.sflag [#allocation4], %s205
        %s207 = sand.u32 %s91, 1
        %s208 = smul.addr %s207, 16
        %s209 = scalar_lea.vmem [#allocation7], %s208
        // Predicated region
        $region37: #{tpu_custom_call.1} parent=27 // pred_check
          %p210 = pneg %p101
        $region38: #{tpu_custom_call.1} parent=27 // pred_check_branch
          %212 = sbr.rel (%p210) target = $region40
        $region39: #{tpu_custom_call.1} parent=27 // pred_region
          %s213 = smul.u32 2, %s24
          %s215 = ssub.s32 256, 256
          %216 = vsyncadd %s206, %s215
          %s217 = smul.addr %s25, 2
          %s218 = sadd.s32 %s213, %s217
          %s219 = smul.addr %s218, 128
          %s220 = scalar_lea.hbm %s2, %s219
          %s221 = sshll.u32 %s209, 4
          %s222 = int_to_ptr.vmem [resolvable:$true] %s221
          %227 = dma.vmem_to_hbm [thread:$0]  %s222, 256, %s220, %s206, 128, 128, 8
        $region40: #{tpu_custom_call.1} parent=27 // pred_fallthru
          _
      $region28: #{tpu_custom_call.1} parent=5 // pred_fallthru
        _
      %p228 = scmp.le.s32.totalorder 2, %s15
      // Predicated region
      $region41: #{tpu_custom_call.1} parent=5 // pred_check
        %p229 = pneg %p228
      $region42: #{tpu_custom_call.1} parent=5 // pred_check_branch
        %231 = sbr.rel (%p229) target = $region44
      $region43: #{tpu_custom_call.1} parent=5 // pred_region
        %s232 = ssub.s32 %s15, 2
        // Predicated region
        $region45: #{tpu_custom_call.1} parent=43 // pred_check
          %p233 = pneg %p107
        $region46: #{tpu_custom_call.1} parent=43 // pred_check_branch
          %235 = sbr.rel (%p233) target = $region48
        $region47: #{tpu_custom_call.1} parent=43 // pred_region
          %s236 = sand.u32 %s92, 1
          %s237 = scalar_lea.sflag [#allocation4], %s236
          %s238 = sand.u32 %s92, 1
          %s239 = smul.addr %s238, 16
          %s240 = scalar_lea.vmem [#allocation7], %s239
          %241 = dma.done %s237, 256
        $region48: #{tpu_custom_call.1} parent=43 // pred_fallthru
          _
      $region44: #{tpu_custom_call.1} parent=5 // pred_fallthru
        _
    $region6: #{tpu_custom_call.1} parent=1 // loop_footer
      %s19 = sadd.s32 1, %s15
    $region7: #{tpu_custom_call.1} parent=1 // loop_footer_branch
      %14 = sbr.rel target = $region3
    $region8: #{tpu_custom_call.1} parent=1 // loop_exit
      _
    %242 = vsyncpa [#allocation3], 1
    %s243 = scalar_lea.sflag [#allocation3], 1
    %244 = vsyncpa %s243, 1
    %245 = vsyncpa [#allocation6], 1
    %246 = vsyncpa [#allocation4], 1
    %s247 = scalar_lea.sflag [#allocation4], 1
    %248 = vsyncpa %s247, 1

</llo_original>
